<compile_context>
chip_gen: v5e
topology: v5e:2x2
jax: 0.10.0
libtpu: 0.0.40
codegen_flags: <defaults>
</compile_context>

<pallas_src>
import functools

import jax
import jax.numpy as jnp
from jax import lax
from jax.experimental import pallas as pl
from jax.experimental.pallas import tpu as pltpu


# ---------------------------------------------------------------------------
# Linear: y = x @ W + b, tiled over rows (M).  W and b use a constant block
# index so they stay resident in VMEM across the grid.
# ---------------------------------------------------------------------------
def _linear_kernel(x_ref, w_ref, b_ref, o_ref):
    acc = jnp.dot(x_ref[...], w_ref[...], preferred_element_type=jnp.float32)
    o_ref[...] = (acc + b_ref[...]).astype(o_ref.dtype)


def linear(x, w, b, *, out_dtype=None, row_tile=256):
    """x: (M, K) @ w: (K, N) + b: (N,) -> (M, N)."""
    M, K = x.shape
    N = w.shape[1]
    out_dtype = out_dtype or x.dtype
    # Fixed tile + cdiv grid: the last partial block (if any) is padded on read
    # and its out-of-bounds rows are discarded on writeback.  If M is smaller
    # than the tile, use the full extent (always BlockSpec-legal).
    tm = min(row_tile, M)
    b2 = b.reshape(1, N).astype(jnp.float32)
    return pl.pallas_call(
        _linear_kernel,
        out_shape=jax.ShapeDtypeStruct((M, N), out_dtype),
        grid_spec=pl.GridSpec(
            grid=(pl.cdiv(M, tm),),
            in_specs=[
                pl.BlockSpec((tm, K), lambda i: (i, 0)),
                pl.BlockSpec((K, N), lambda i: (0, 0)),   # VMEM-resident weight
                pl.BlockSpec((1, N), lambda i: (0, 0)),   # VMEM-resident bias
            ],
            out_specs=pl.BlockSpec((tm, N), lambda i: (i, 0)),
        ),
        compiler_params=pltpu.CompilerParams(
            dimension_semantics=("parallel",)),
    )(x, w, b2)


# ---------------------------------------------------------------------------
# Attention core: one image (all H heads) per grid step.
# Input block : (1, N, 3C) slice of the qkv activation, PyTorch column layout
#               [q|k|v] x [head] x [head_dim].
# Output block: (1, N, C) context with heads already merged (lane-dense store).
# ---------------------------------------------------------------------------
def _attention_kernel(qkv_ref, o_ref, *, heads, head_dim, scale, exp_dtype):
    C = heads * head_dim
    qkv = qkv_ref[0]                                   # (N, 3C), single full load

    ctx_heads = []
    for h in range(heads):                             # unrolled; independent heads
        q = qkv[:, h * head_dim:(h + 1) * head_dim] * scale          # scale folded into q
        k = qkv[:, C + h * head_dim:C + (h + 1) * head_dim]
        v = qkv[:, 2 * C + h * head_dim:2 * C + (h + 1) * head_dim]

        # q @ k^T without materializing k.T: contract last dim of both operands.
        s = lax.dot_general(q, k, (((1,), (1,)), ((), ())),
                            preferred_element_type=jnp.float32)       # (N, N)
        s = s - jnp.max(s, axis=-1, keepdims=True)
        p = jnp.exp(s.astype(exp_dtype))                              # unnormalized probs
        denom = jnp.sum(p, axis=-1, keepdims=True).astype(jnp.float32)  # (N, 1)

        ctx = jnp.dot(p.astype(v.dtype), v,
                      preferred_element_type=jnp.float32)             # (N, hd)
        # Deferred normalization on the (N, hd) context (3x less VPU work than
        # normalizing the (N, N) probabilities); approx reciprocal rides the EUP.
        ctx = ctx * pl.reciprocal(denom, approx=True)
        ctx_heads.append(ctx)

    out = jnp.concatenate(ctx_heads, axis=-1)          # (N, C): head merge in VMEM
    o_ref[0] = out.astype(o_ref.dtype)                 # single lane-dense store


def attention_core(qkv, *, num_heads, scale, out_dtype=None,
                   exp_dtype=jnp.float32):
    """qkv: (B, N, 3C) -> per-image multi-head attention context (B, N, C)."""
    B, N, C3 = qkv.shape
    C = C3 // 3
    out_dtype = out_dtype or qkv.dtype
    kernel = functools.partial(
        _attention_kernel, heads=num_heads, head_dim=C // num_heads,
        scale=scale, exp_dtype=exp_dtype)
    return pl.pallas_call(
        kernel,
        out_shape=jax.ShapeDtypeStruct((B, N, C), out_dtype),
        grid_spec=pl.GridSpec(
            grid=(B,),
            in_specs=[pl.BlockSpec((1, N, C3), lambda b: (b, 0, 0))],
            out_specs=pl.BlockSpec((1, N, C), lambda b: (b, 0, 0)),
        ),
        compiler_params=pltpu.CompilerParams(
            dimension_semantics=("parallel",)),
    )(qkv)


# ---------------------------------------------------------------------------
# Full Attention.forward, PyTorch weight layout (out_features, in_features).
# No head split/merge transposes in JAX: all reshapes here are metadata-only.
# ---------------------------------------------------------------------------
def attention_forward(x, qkv_w, qkv_b, proj_w, proj_b, *, num_heads,
                      qk_scale=None, compute_dtype=None,
                      exp_dtype=jnp.float32, row_tile=256):
    B, N, C = x.shape
    hd = C // num_heads
    scale = qk_scale if qk_scale is not None else hd ** (-0.5)
    # Production on v6e/v7x: pass compute_dtype=jnp.bfloat16 (and optionally
    # exp_dtype=jnp.bfloat16).  v5e: bf16 matmul operands only, keep exp in f32.
    cdt = compute_dtype or x.dtype

    # --- qkv projection (row-tiled matmul kernel) ---------------------------
    x2 = x.reshape(B * N, C).astype(cdt)                          # free reshape
    w_qkv = qkv_w.T.astype(cdt)                                   # (C, 3C), one-time weight prep
    b_qkv = qkv_b if qkv_b is not None else jnp.zeros((3 * C,), jnp.float32)
    qkv = linear(x2, w_qkv, b_qkv, out_dtype=cdt, row_tile=row_tile)  # (B*N, 3C)
    qkv = qkv.reshape(B, N, 3 * C)                                # free reshape (no HBM transpose)

    # --- attention (per-image kernel, heads handled in VMEM) ----------------
    ctx = attention_core(qkv, num_heads=num_heads, scale=scale,
                         out_dtype=cdt, exp_dtype=exp_dtype)      # (B, N, C)

    # --- output projection ---------------------------------------------------
    out = linear(ctx.reshape(B * N, C), proj_w.T.astype(cdt), proj_b,
                 out_dtype=x.dtype, row_tile=row_tile)
    # attn_drop / proj_drop: ratio 0.0 -> identity (inference).  Nonzero ratios
    # would use pltpu.prng_seed / pltpu.prng_random_bits inside the kernels.
    return out.reshape(B, N, C)


if __name__ == "__main__":
    # Small shapes consistent with the module: B=2, seq N=8, dim C=32,
    # num_heads=8 -> head_dim=4, scale = 4**-0.5, qkv_bias=False (default).
    B, N, C, H = 2, 8, 32, 8

    key = jax.random.PRNGKey(0)
    kx, kq, kp, kb = jax.random.split(key, 4)
    x = jax.random.normal(kx, (B, N, C), dtype=jnp.float32)
    qkv_w = jax.random.normal(kq, (3 * C, C), dtype=jnp.float32) * 0.02  # (out, in)
    proj_w = jax.random.normal(kp, (C, C), dtype=jnp.float32) * 0.02
    proj_b = jax.random.normal(kb, (C,), dtype=jnp.float32) * 0.02
    qkv_b = None   # qkv_bias=False

    out = attention_forward(x, qkv_w, qkv_b, proj_w, proj_b, num_heads=H)
    out = jax.block_until_ready(out)

    # Pure-JAX f32 reference (same math as the PyTorch module).
    hd = C // H
    scale = hd ** (-0.5)
    hp = jax.lax.Precision.HIGHEST
    qkv_ref = jnp.einsum("bnc,dc->bnd", x, qkv_w, precision=hp)
    qkv_ref = qkv_ref.reshape(B, N, 3, H, hd).transpose(2, 0, 3, 1, 4)
    q_r, k_r, v_r = qkv_ref[0], qkv_ref[1], qkv_ref[2]
    attn = jnp.einsum("bhqd,bhkd->bhqk", q_r, k_r, precision=hp) * scale
    attn = jax.nn.softmax(attn, axis=-1)
    ref = jnp.einsum("bhqk,bhkd->bhqd", attn, v_r, precision=hp)
    ref = ref.transpose(0, 2, 1, 3).reshape(B, N, C)
    ref = jnp.einsum("bnc,dc->bnd", ref, proj_w, precision=hp) + proj_b

    assert out.shape == (B, N, C)
    err = float(jnp.max(jnp.abs(out - ref)))
    assert jnp.allclose(out, ref, atol=2e-3, rtol=2e-3), err
    print("KERNEL_OK")
</pallas_src>

<mosaic_0001>
module attributes {stable_mosaic.version = 11 : i64} {
  func.func @_linear_kernel(%arg0: i32, %arg1: memref<16x32xf32, #tpu.memory_space<vmem>>, %arg2: memref<32x96xf32, #tpu.memory_space<vmem>>, %arg3: memref<1x96xf32, #tpu.memory_space<vmem>>, %arg4: memref<16x96xf32, #tpu.memory_space<vmem>>) attributes {dimension_semantics = [#tpu.dimension_semantics<parallel>], iteration_bounds = array<i64: 1>, scalar_prefetch = 0 : i64, scratch_operands = 0 : i64, tpu.core_type = #tpu.core_type<tc>, window_params = [{transform_indices = @transform_0, window_bounds = array<i64: 16, 32>}, {pipeline_mode = #tpu.pipeline_mode<synchronous>, transform_indices = @transform_1, window_bounds = array<i64: 32, 96>}, {pipeline_mode = #tpu.pipeline_mode<synchronous>, transform_indices = @transform_2, window_bounds = array<i64: 1, 96>}, {transform_indices = @transform_3, window_bounds = array<i64: 16, 96>}]} {
    %c0 = arith.constant 0 : index
    %c0_0 = arith.constant 0 : index
    %0 = vector.load %arg1[%c0, %c0_0] : memref<16x32xf32, #tpu.memory_space<vmem>>, vector<16x32xf32>
    %c0_1 = arith.constant 0 : index
    %c0_2 = arith.constant 0 : index
    %1 = vector.load %arg2[%c0_1, %c0_2] : memref<32x96xf32, #tpu.memory_space<vmem>>, vector<32x96xf32>
    %cst = arith.constant dense<0.000000e+00> : vector<16x96xf32>
    %2 = tpu.matmul %0, %1, %cst {dimension_numbers = #tpu.dot_dimension_numbers<[1], [0], [0], [1], [0, 0, 1, 1], [], []>} : vector<16x32xf32>, vector<32x96xf32>, vector<16x96xf32> -> vector<16x96xf32>
    %c0_3 = arith.constant 0 : index
    %c0_4 = arith.constant 0 : index
    %3 = vector.load %arg3[%c0_3, %c0_4] : memref<1x96xf32, #tpu.memory_space<vmem>>, vector<1x96xf32>
    %4 = vector.broadcast %3 : vector<1x96xf32> to vector<16x96xf32>
    %5 = arith.addf %2, %4 : vector<16x96xf32>
    %c0_5 = arith.constant 0 : index
    %c0_6 = arith.constant 0 : index
    %6 = vector.load %arg4[%c0_5, %c0_6] : memref<16x96xf32, #tpu.memory_space<vmem>>, vector<16x96xf32>
    tpu.vector_store %arg4[%c0_5, %c0_6], %5 {strides = array<i32>} : memref<16x96xf32, #tpu.memory_space<vmem>>, vector<16x96xf32>,
    return
  }
  func.func @transform_0(%arg0: i32) -> (i32, i32) {
    %c0_i32 = arith.constant 0 : i32
    %c0_i32_0 = arith.constant 0 : i32
    return %arg0, %c0_i32 : i32, i32
  }
  func.func @transform_1(%arg0: i32) -> (i32, i32) {
    %c0_i32 = arith.constant 0 : i32
    %c0_i32_0 = arith.constant 0 : i32
    %c0_i32_1 = arith.constant 0 : i32
    return %c0_i32, %c0_i32_0 : i32, i32
  }
  func.func @transform_2(%arg0: i32) -> (i32, i32) {
    %c0_i32 = arith.constant 0 : i32
    %c0_i32_0 = arith.constant 0 : i32
    %c0_i32_1 = arith.constant 0 : i32
    return %c0_i32, %c0_i32_0 : i32, i32
  }
  func.func @transform_3(%arg0: i32) -> (i32, i32) {
    %c0_i32 = arith.constant 0 : i32
    %c0_i32_0 = arith.constant 0 : i32
    return %arg0, %c0_i32 : i32, i32
  }
}

</mosaic_0001>

<llo_original>
// kernel: tpu_custom_call.1
$region0: #{tpu_custom_call.1}
  #allocation0 [shape = 'u32[]', space=smem, size = 0x4, offset = 0x4, fixed_abs, tag = 'smem constant byte address 0x4 - core index']
  #allocation1 [shape = 'u32[72,128]{1,0:T(1,128)}', space=vmem, size = 0x9000, scoped, tag = 'internal scratch']
  %s0 = inlined_call_operand.hbm [shape: f32[16,32], index: 0, kind: input, shape index: {}]
  %s1 = inlined_call_operand.hbm [shape: f32[32,96], index: 1, kind: input, shape index: {}]
  %s2 = inlined_call_operand.vmem [shape: f32[1,96], index: 2, kind: input, shape index: {}]
  %s3 = inlined_call_operand.hbm [shape: f32[16,96], index: 3, kind: output, shape index: {}]
  %s4 = sld [smem:[#allocation0]]
  $region30: #{tpu_custom_call.1} parent=0
    _
  %s6 = ssub.s32 1, %s4
  %s7 = scalar_select 0, %s6, %s4
  $region1: #{tpu_custom_call.1} parent=0
    #allocation2 [shape = 'u8[8192]{0}', space=vmem, size = 0x2000, scoped, tag = 'input window, operand 0, single buffered']
    #allocation3 [shape = 's32[1]{0}', space=sflag, size = 0x4, scoped, tag = 'scoped memory for tpu_custom_call.1']
    #allocation4 [shape = 's32[1]{0}', space=sflag, size = 0x4, scoped, tag = 'scoped memory for tpu_custom_call.1']
    #allocation5 [shape = 'u8[16384]{0}', space=vmem, size = 0x4000, scoped, tag = 'input window, operand 1, single buffered']
    #allocation6 [shape = 's32[1]{0}', space=sflag, size = 0x4, scoped, tag = 'scoped memory for tpu_custom_call.1']
    #allocation7 [shape = 'u8[8192]{0}', space=vmem, size = 0x2000, scoped, tag = 'output window, operand 0, single buffered']
    %8 = vsyncpa [#allocation3], 0
    %9 = vsyncpa [#allocation6], 0
    %10 = vsyncpa [#allocation4], 0
    // Predicated region
    $region2: #{tpu_custom_call.1} parent=1 // pred_check
      _
    $region3: #{tpu_custom_call.1} parent=1 // pred_check_branch
      %12 = sbr.rel (0) target = $region5
    $region4: #{tpu_custom_call.1} parent=1 // pred_region
      %14 = vsyncadd [#allocation3], 0
      %s15 = sshll.u32 %s0, 4
      %s16 = int_to_ptr.hbm [resolvable:$true] %s15
      %s17 = sshll.u32 [#allocation2], 4
      %s18 = int_to_ptr.vmem [resolvable:$true] %s17
      %23 = dma.hbm_to_vmem [thread:$0]  %s16, 256, %s18, [#allocation3], 128, 128, 8
    $region5: #{tpu_custom_call.1} parent=1 // pred_fallthru
      _
    // Predicated region
    $region6: #{tpu_custom_call.1} parent=1 // pred_check
      _
    $region7: #{tpu_custom_call.1} parent=1 // pred_check_branch
      %25 = sbr.rel (0) target = $region9
    $region8: #{tpu_custom_call.1} parent=1 // pred_region
      %27 = vsyncadd [#allocation6], 0
      %s28 = sshll.u32 %s1, 4
      %s29 = int_to_ptr.hbm [resolvable:$true] %s28
      %s30 = sshll.u32 [#allocation5], 4
      %s31 = int_to_ptr.vmem [resolvable:$true] %s30
      %36 = dma.hbm_to_vmem [thread:$0]  %s29, 512, %s31, [#allocation6], 128, 128, 8
    $region9: #{tpu_custom_call.1} parent=1 // pred_fallthru
      _
    // Predicated region
    $region10: #{tpu_custom_call.1} parent=1 // pred_check
      _
    $region11: #{tpu_custom_call.1} parent=1 // pred_check_branch
      %38 = sbr.rel (0) target = $region13
    $region12: #{tpu_custom_call.1} parent=1 // pred_region
      _
    $region13: #{tpu_custom_call.1} parent=1 // pred_fallthru
      _
    // Predicated region
    $region14: #{tpu_custom_call.1} parent=1 // pred_check
      _
    $region15: #{tpu_custom_call.1} parent=1 // pred_check_branch
      %40 = sbr.rel (0) target = $region17
    $region16: #{tpu_custom_call.1} parent=1 // pred_region
      %42 = dma.done [#allocation3], 256
    $region17: #{tpu_custom_call.1} parent=1 // pred_fallthru
      _
    // Predicated region
    $region18: #{tpu_custom_call.1} parent=1 // pred_check
      _
    $region19: #{tpu_custom_call.1} parent=1 // pred_check_branch
      %44 = sbr.rel (0) target = $region21
    $region20: #{tpu_custom_call.1} parent=1 // pred_region
      %46 = dma.done [#allocation6], 512
    $region21: #{tpu_custom_call.1} parent=1 // pred_fallthru
      _
    %v47 = vld [vmem:[#allocation2] sm:$0xff]
    %v48 = vld [vmem:[#allocation2 + $0x8] sm:$0xff]
    %v49 = vld [vmem:[#allocation5] sm:$0xff]
    %v50 = vld [vmem:[#allocation5 + $0x8] sm:$0xff]
    %v51 = vld [vmem:[#allocation5 + $0x10] sm:$0xff]
    %v52 = vld [vmem:[#allocation5 + $0x18] sm:$0xff]
    %v53 = vld [vmem:[%s2] sm:$0x1]
    %v55 = vperm.slane %v53, 0
    %vm57 = vcmask 261120
    %v59 = vsel %vm57, %v47, 0
    %v62 = vsel %vm57, %v48, 0
    %64 = vmatpush.msra.mxu0 0.0
    %65 = vmatpush.msra.mxu0 0.0
    %66 = vmatpush.msra.mxu0 0.0
    %67 = vmatpush.msra.mxu0 0.0
    %68 = vmatpush.msra.mxu0 0.0
    %69 = vmatpush.msra.mxu0 0.0
    %70 = vmatpush.msra.mxu0 0.0
    %71 = vmatpush.msra.mxu0 0.0
    %72 = vmatpush.msra.mxu0 0.0
    %73 = vmatpush.msra.mxu0 0.0
    %74 = vmatpush.msra.mxu0 0.0
    %75 = vmatpush.msra.mxu0 0.0
    %76 = vmatpush.msra.mxu0 %v52
    %77 = vmatpush.msra.mxu0 %v51
    %78 = vmatpush.msra.mxu0 %v50
    %79 = vmatpush.msra.mxu0 %v49
    %80 = vmatmul.f32.gmra.mxu0 %v59
    %v81 = vpop.f32.mrf.mxu0
    %v82 = vadd.f32 %v55, %v81
    %83 = vmatmul.f32.gmra.mxu0 %v62
    %v84 = vpop.f32.mrf.mxu0
    %v85 = vadd.f32 %v55, %v84
    %86 = vdwg.mxu0
    %vm87 = vcmask 785408
    %88 = vst.msk [vmem:[#allocation7] sm:$0xff] %vm87, %v82
    %89 = vst.msk [vmem:[#allocation7 + $0x8] sm:$0xff] %vm87, %v85
    // Predicated region
    $region22: #{tpu_custom_call.1} parent=1 // pred_check
      _
    $region23: #{tpu_custom_call.1} parent=1 // pred_check_branch
      %91 = sbr.rel (0) target = $region25
    $region24: #{tpu_custom_call.1} parent=1 // pred_region
      %93 = vsyncadd [#allocation4], 0
      %s94 = sshll.u32 [#allocation7], 4
      %s95 = int_to_ptr.vmem [resolvable:$true] %s94
      %s96 = sshll.u32 %s3, 4
      %s97 = int_to_ptr.hbm [resolvable:$true] %s96
      %102 = dma.vmem_to_hbm [thread:$0]  %s95, 256, %s97, [#allocation4], 128, 128, 8
    $region25: #{tpu_custom_call.1} parent=1 // pred_fallthru
      _
    // Predicated region
    $region26: #{tpu_custom_call.1} parent=1 // pred_check
      _
    $region27: #{tpu_custom_call.1} parent=1 // pred_check_branch
      %104 = sbr.rel (0) target = $region29
    $region28: #{tpu_custom_call.1} parent=1 // pred_region
      %106 = dma.done [#allocation4], 256
    $region29: #{tpu_custom_call.1} parent=1 // pred_fallthru
      _
    %107 = vsyncpa [#allocation3], 1
    %108 = vsyncpa [#allocation6], 1
    %109 = vsyncpa [#allocation4], 1

</llo_original>
